<compile_context>
chip_gen: v6e
topology: v6e:2x2x1
jax: 0.10.0
libtpu: 0.0.40
codegen_flags: <defaults>
</compile_context>

<pallas_src>
import jax
import jax.numpy as jnp
from jax.experimental import pallas as pl
from jax.experimental.pallas import tpu as pltpu

INPUT_DIM = 2
HIDDEN_DIM = 64
LANES = 128


# ----------------------------------------------------------------------------
# Shared in-kernel math (transposed layout: batch on the lane axis).
# ----------------------------------------------------------------------------
def _mlp_transposed(xT, p_ref, in_dim):
    """y^T = W2^T @ tanh(W1^T @ x^T + b1) + b2, done on VPU/XLU/EUP only.

    xT    : (in_dim, B) f32 value, batch on lanes.
    p_ref : (hidden, 2*in_dim + 2) f32 VMEM ref, packed as
            [:, 0:in_dim]            -> W1^T   (hidden, in_dim)
            [:, in_dim]              -> b1     (hidden,)
            [:, in_dim+1:2*in_dim+1] -> W2     (hidden, in_dim)
            [0:in_dim, 2*in_dim+1]   -> b2     (in_dim,)
    returns (in_dim, B) f32.
    """
    # ---- layer 1: K = in_dim FMAs on the VPU (no MXU) -----------------------
    acc = p_ref[:, in_dim:in_dim + 1]                     # b1 column, (H, 1)
    for j in range(in_dim):
        acc = acc + p_ref[:, j:j + 1] * xT[j:j + 1, :]    # (H,1)*(1,B) -> (H,B)
    h = jnp.tanh(acc)                                     # (H, B) on the EUP

    # ---- layer 2: N = in_dim multiply + cross-sublane reduce (XLU) ----------
    w2_off = in_dim + 1
    b2_off = 2 * in_dim + 1
    rows = []
    for i in range(in_dim):
        w2c = p_ref[:, w2_off + i:w2_off + i + 1]         # (H, 1)
        b2i = p_ref[i:i + 1, b2_off:b2_off + 1]           # (1, 1)
        rows.append(jnp.sum(h * w2c, axis=0, keepdims=True) + b2i)  # (1, B)
    return jnp.concatenate(rows, axis=0)                  # (in_dim, B)


# ----------------------------------------------------------------------------
# Kernels
# ----------------------------------------------------------------------------
def _make_forward_kernel(in_dim):
    def kernel(xT_ref, p_ref, oT_ref):
        xT = xT_ref[...].astype(jnp.float32)
        oT_ref[...] = _mlp_transposed(xT, p_ref, in_dim).astype(oT_ref.dtype)
    return kernel


def _make_euler_kernel(in_dim, dt):
    # One grid step per solver step; the state lives in the (resident) output
    # block, parameters are DMA'd exactly once.
    def kernel(xT_ref, p_ref, oT_ref):
        @pl.when(pl.program_id(0) == 0)
        def _init():
            oT_ref[...] = xT_ref[...].astype(oT_ref.dtype)

        xT = oT_ref[...]
        dxT = _mlp_transposed(xT, p_ref, in_dim)
        oT_ref[...] = xT + dt * dxT
    return kernel


# ----------------------------------------------------------------------------
# Host-side wrappers
# ----------------------------------------------------------------------------
def _pad_transpose(x, b_pad):
    batch, in_dim = x.shape
    xT = jnp.zeros((in_dim, b_pad), jnp.float32)
    return xT.at[:, :batch].set(jnp.transpose(x).astype(jnp.float32))


def odefunc_forward(t, x, packed_params):
    """Mirrors ODEFunc.forward(t, x); `t` is unused (as in torch)."""
    del t
    batch, in_dim = x.shape
    b_pad = pl.cdiv(batch, LANES) * LANES                 # lane-dense batch axis
    xT = _pad_transpose(x, b_pad)

    oT = pl.pallas_call(
        _make_forward_kernel(in_dim),
        out_shape=jax.ShapeDtypeStruct((in_dim, b_pad), jnp.float32),
        in_specs=[
            pl.BlockSpec((in_dim, b_pad), lambda: (0, 0)),
            pl.BlockSpec(packed_params.shape, lambda: (0, 0)),
        ],
        out_specs=pl.BlockSpec((in_dim, b_pad), lambda: (0, 0)),
    )(xT, packed_params)

    return jnp.transpose(oT[:, :batch]).astype(x.dtype)


def odefunc_euler_rollout(x0, packed_params, n_steps, dt):
    """n_steps of explicit Euler (x += dt * net(x)) fused into ONE pallas_call."""
    batch, in_dim = x0.shape
    b_pad = pl.cdiv(batch, LANES) * LANES
    xT = _pad_transpose(x0, b_pad)

    oT = pl.pallas_call(
        _make_euler_kernel(in_dim, float(dt)),
        out_shape=jax.ShapeDtypeStruct((in_dim, b_pad), jnp.float32),
        grid=(n_steps,),
        in_specs=[
            pl.BlockSpec((in_dim, b_pad), lambda s: (0, 0)),
            pl.BlockSpec(packed_params.shape, lambda s: (0, 0)),
        ],
        out_specs=pl.BlockSpec((in_dim, b_pad), lambda s: (0, 0)),
        compiler_params=pltpu.CompilerParams(dimension_semantics=("arbitrary",)),
    )(xT, packed_params)

    return jnp.transpose(oT[:, :batch]).astype(x0.dtype)


# ----------------------------------------------------------------------------
# Parameters
# ----------------------------------------------------------------------------
def init_params(key, input_dim=INPUT_DIM, hidden_dim=HIDDEN_DIM, dtype=jnp.float32):
    """Synthetic init matching nn.Linear (stored in math orientation:
    y = tanh(x @ W1 + b1) @ W2 + b2)."""
    k1, k2, k3, k4 = jax.random.split(key, 4)
    lim1 = 1.0 / jnp.sqrt(input_dim)
    lim2 = 1.0 / jnp.sqrt(hidden_dim)
    w1 = jax.random.uniform(k1, (input_dim, hidden_dim), dtype, -lim1, lim1)
    b1 = jax.random.uniform(k2, (hidden_dim,), dtype, -lim1, lim1)
    w2 = jax.random.uniform(k3, (hidden_dim, input_dim), dtype, -lim2, lim2)
    b2 = jax.random.uniform(k4, (input_dim,), dtype, -lim2, lim2)
    return w1, b1, w2, b2


def pack_params(w1, b1, w2, b2):
    """One-time packing of all parameters into a single (hidden, 2*in_dim+2)
    f32 slab (2 DMAs per call instead of 5)."""
    in_dim, hidden = w1.shape
    p = jnp.zeros((hidden, 2 * in_dim + 2), jnp.float32)
    p = p.at[:, 0:in_dim].set(jnp.transpose(w1).astype(jnp.float32))
    p = p.at[:, in_dim].set(b1.astype(jnp.float32))
    p = p.at[:, in_dim + 1:2 * in_dim + 1].set(w2.astype(jnp.float32))
    p = p.at[0:in_dim, 2 * in_dim + 1].set(b2.astype(jnp.float32))
    return p


# ----------------------------------------------------------------------------
# Test
# ----------------------------------------------------------------------------
if __name__ == "__main__":
    key = jax.random.PRNGKey(0)
    k_params, k_x = jax.random.split(key)

    batch = 8
    w1, b1, w2, b2 = init_params(k_params)
    packed = pack_params(w1, b1, w2, b2)
    x = jax.random.normal(k_x, (batch, INPUT_DIM), dtype=jnp.float32)
    t = jnp.float32(0.0)  # unused, kept for API parity with forward(t, x)

    def reference(xx):
        h = jnp.tanh(jnp.dot(xx, w1, precision=jax.lax.Precision.HIGHEST) + b1)
        return jnp.dot(h, w2, precision=jax.lax.Precision.HIGHEST) + b2

    # Single forward (module semantics).
    out = jax.block_until_ready(odefunc_forward(t, x, packed))
    ref = reference(x)
    assert out.shape == (batch, INPUT_DIM)
    assert jnp.allclose(out, ref, atol=1e-5, rtol=1e-5)

    # Fused-integrator demo: amortizes launch + weight DMA over all solver steps.
    n_steps, dt = 16, 0.05
    rolled = jax.block_until_ready(odefunc_euler_rollout(x, packed, n_steps, dt))
    x_ref = x
    for _ in range(n_steps):
        x_ref = x_ref + dt * reference(x_ref)
    assert rolled.shape == (batch, INPUT_DIM)
    assert jnp.allclose(rolled, x_ref, atol=1e-4, rtol=1e-4)

    # TODO(synk): adaptive-step solvers (e.g. dopri5) need host-side step-size
    # control and are left to the caller; only the fixed-step loop is fused here.
    print("KERNEL_OK")
</pallas_src>

<mosaic_0001>
module attributes {stable_mosaic.version = 11 : i64} {
  func.func @kernel(%arg0: memref<2x128xf32, #tpu.memory_space<vmem>>, %arg1: memref<64x6xf32, #tpu.memory_space<vmem>>, %arg2: memref<2x128xf32, #tpu.memory_space<vmem>>) attributes {dimension_semantics = [], scalar_prefetch = 0 : i64, scratch_operands = 0 : i64, tpu.core_type = #tpu.core_type<tc>} {
    %c0 = arith.constant 0 : index
    %c0_0 = arith.constant 0 : index
    %0 = vector.load %arg0[%c0, %c0_0] : memref<2x128xf32, #tpu.memory_space<vmem>>, vector<2x128xf32>
    %c0_1 = arith.constant 0 : index
    %c2 = arith.constant 2 : index
    %1 = vector.load %arg1[%c0_1, %c2] : memref<64x6xf32, #tpu.memory_space<vmem>>, vector<64x1xf32>
    %c0_2 = arith.constant 0 : index
    %c0_3 = arith.constant 0 : index
    %2 = vector.load %arg1[%c0_2, %c0_3] : memref<64x6xf32, #tpu.memory_space<vmem>>, vector<64x1xf32>
    %3 = vector.extract_strided_slice %0 {offsets = [0, 0], sizes = [1, 128], strides = [1, 1]} : vector<2x128xf32> to vector<1x128xf32>
    %4 = vector.broadcast %2 : vector<64x1xf32> to vector<64x128xf32>
    %5 = vector.broadcast %3 : vector<1x128xf32> to vector<64x128xf32>
    %6 = arith.mulf %4, %5 : vector<64x128xf32>
    %7 = vector.broadcast %1 : vector<64x1xf32> to vector<64x128xf32>
    %8 = arith.addf %7, %6 : vector<64x128xf32>
    %c0_4 = arith.constant 0 : index
    %c1 = arith.constant 1 : index
    %9 = vector.load %arg1[%c0_4, %c1] : memref<64x6xf32, #tpu.memory_space<vmem>>, vector<64x1xf32>
    %10 = vector.extract_strided_slice %0 {offsets = [1, 0], sizes = [1, 128], strides = [1, 1]} : vector<2x128xf32> to vector<1x128xf32>
    %11 = vector.broadcast %9 : vector<64x1xf32> to vector<64x128xf32>
    %12 = vector.broadcast %10 : vector<1x128xf32> to vector<64x128xf32>
    %13 = arith.mulf %11, %12 : vector<64x128xf32>
    %14 = arith.addf %8, %13 : vector<64x128xf32>
    %15 = math.tanh %14 : vector<64x128xf32>
    %c0_5 = arith.constant 0 : index
    %c3 = arith.constant 3 : index
    %16 = vector.load %arg1[%c0_5, %c3] : memref<64x6xf32, #tpu.memory_space<vmem>>, vector<64x1xf32>
    %c0_6 = arith.constant 0 : index
    %c5 = arith.constant 5 : index
    %17 = vector.load %arg1[%c0_6, %c5] : memref<64x6xf32, #tpu.memory_space<vmem>>, vector<1x1xf32>
    %18 = vector.broadcast %16 : vector<64x1xf32> to vector<64x128xf32>
    %19 = arith.mulf %15, %18 : vector<64x128xf32>
    %cst = arith.constant dense<0.000000e+00> : vector<128xf32>
    %20 = vector.multi_reduction <add>, %19, %cst [0] : vector<64x128xf32> to vector<128xf32>
    %21 = vector.shape_cast %20 : vector<128xf32> to vector<1x128xf32>
    %22 = vector.broadcast %17 : vector<1x1xf32> to vector<1x128xf32>
    %23 = arith.addf %21, %22 : vector<1x128xf32>
    %c0_7 = arith.constant 0 : index
    %c4 = arith.constant 4 : index
    %24 = vector.load %arg1[%c0_7, %c4] : memref<64x6xf32, #tpu.memory_space<vmem>>, vector<64x1xf32>
    %c1_8 = arith.constant 1 : index
    %c5_9 = arith.constant 5 : index
    %25 = vector.load %arg1[%c1_8, %c5_9] : memref<64x6xf32, #tpu.memory_space<vmem>>, vector<1x1xf32>
    %26 = vector.broadcast %24 : vector<64x1xf32> to vector<64x128xf32>
    %27 = arith.mulf %15, %26 : vector<64x128xf32>
    %cst_10 = arith.constant dense<0.000000e+00> : vector<128xf32>
    %28 = vector.multi_reduction <add>, %27, %cst_10 [0] : vector<64x128xf32> to vector<128xf32>
    %29 = vector.shape_cast %28 : vector<128xf32> to vector<1x128xf32>
    %30 = vector.broadcast %25 : vector<1x1xf32> to vector<1x128xf32>
    %31 = arith.addf %29, %30 : vector<1x128xf32>
    %32 = tpu.concatenate %23, %31 in 0 : vector<1x128xf32>, vector<1x128xf32> -> vector<2x128xf32>
    %c0_11 = arith.constant 0 : index
    %c0_12 = arith.constant 0 : index
    %33 = vector.load %arg2[%c0_11, %c0_12] : memref<2x128xf32, #tpu.memory_space<vmem>>, vector<2x128xf32>
    tpu.vector_store %arg2[%c0_11, %c0_12], %32 {strides = array<i32>} : memref<2x128xf32, #tpu.memory_space<vmem>>, vector<2x128xf32>,
    return
  }
}

</mosaic_0001>

<llo_original>
// kernel: tpu_custom_call.1
$region0: #{tpu_custom_call.1}
  #allocation0 [shape = 'u32[]', space=smem, size = 0x4, offset = 0x4, fixed_abs, tag = 'smem constant byte address 0x4 - core index']
  #allocation1 [shape = 'u32[144,128]{1,0:T(1,128)}', space=vmem, size = 0x12000, scoped, tag = 'internal scratch']
  %s0 = inlined_call_operand.vmem [shape: f32[2,128], index: 0, kind: input, shape index: {}]
  %s1 = inlined_call_operand.vmem [shape: f32[64,6], index: 1, kind: input, shape index: {}]
  %s2 = inlined_call_operand.hbm [shape: f32[2,128], index: 2, kind: output, shape index: {}]
  %s3 = sld [smem:[#allocation0]]
  $region18: #{tpu_custom_call.1} parent=0
    _
  %s5 = ssub.s32 1, %s3
  %s6 = scalar_select 0, %s5, %s3
  $region1: #{tpu_custom_call.1} parent=0
    #allocation2 [shape = 'u8[1024]{0}', space=vmem, size = 0x400, scoped, tag = 'output window, operand 0, single buffered']
    #allocation3 [shape = 's32[1]{0}', space=sflag, size = 0x4, scoped, tag = 'scoped memory for tpu_custom_call.1']
    %7 = vsyncpa [#allocation3], 0
    // Predicated region
    $region2: #{tpu_custom_call.1} parent=1 // pred_check
      _
    $region3: #{tpu_custom_call.1} parent=1 // pred_check_branch
      %9 = sbr.rel (0) target = $region5
    $region4: #{tpu_custom_call.1} parent=1 // pred_region
      _
    $region5: #{tpu_custom_call.1} parent=1 // pred_fallthru
      _
    // Predicated region
    $region6: #{tpu_custom_call.1} parent=1 // pred_check
      _
    $region7: #{tpu_custom_call.1} parent=1 // pred_check_branch
      %11 = sbr.rel (0) target = $region9
    $region8: #{tpu_custom_call.1} parent=1 // pred_region
      _
    $region9: #{tpu_custom_call.1} parent=1 // pred_fallthru
      _
    %v12 = vld [vmem:[%s0] sm:$0x3]
    %v13 = vld [vmem:[%s1] sm:$0xff]
    %v14 = vld [vmem:[%s1 + $0x8] sm:$0xff]
    %v15 = vld [vmem:[%s1 + $0x10] sm:$0xff]
    %v16 = vld [vmem:[%s1 + $0x18] sm:$0xff]
    %v17 = vld [vmem:[%s1 + $0x20] sm:$0xff]
    %v18 = vld [vmem:[%s1 + $0x28] sm:$0xff]
    %v19 = vld [vmem:[%s1 + $0x30] sm:$0xff]
    %v20 = vld [vmem:[%s1 + $0x38] sm:$0xff]
    %22 = vset.pattern.permute.xlu0 0
    %23 = vperm.xlu0 %22, %v13
    %v24 = vpop.permute.xlu0 %23
    %27 = vset.pattern.permute.xlu0 0
    %28 = vperm.xlu0 %27, %v14
    %v29 = vpop.permute.xlu0 %28
    %32 = vset.pattern.permute.xlu0 0
    %33 = vperm.xlu0 %32, %v15
    %v34 = vpop.permute.xlu0 %33
    %37 = vset.pattern.permute.xlu0 0
    %38 = vperm.xlu0 %37, %v16
    %v39 = vpop.permute.xlu0 %38
    %42 = vset.pattern.permute.xlu0 0
    %43 = vperm.xlu0 %42, %v17
    %v44 = vpop.permute.xlu0 %43
    %47 = vset.pattern.permute.xlu0 0
    %48 = vperm.xlu0 %47, %v18
    %v49 = vpop.permute.xlu0 %48
    %52 = vset.pattern.permute.xlu0 0
    %53 = vperm.xlu0 %52, %v19
    %v54 = vpop.permute.xlu0 %53
    %57 = vset.pattern.permute.xlu0 0
    %58 = vperm.xlu0 %57, %v20
    %v59 = vpop.permute.xlu0 %58
    %v61 = vlaneseq
    %v62 = vshrl.u32 %v61, 7
    %v63 = vsub.s32 0, %v62
    %v64 = vrot.slane %v12, %v63
    %v65 = vmul.f32 %v24, %v64
    %v66 = vmul.f32 %v29, %v64
    %v67 = vmul.f32 %v34, %v64
    %v68 = vmul.f32 %v39, %v64
    %v69 = vmul.f32 %v44, %v64
    %v70 = vmul.f32 %v49, %v64
    %v71 = vmul.f32 %v54, %v64
    %v72 = vmul.f32 %v59, %v64
    %73 = vset.pattern.permute.xlu0 2
    %74 = vperm.xlu0 %73, %v13
    %v75 = vpop.permute.xlu0 %74
    %77 = vset.pattern.permute.xlu0 2
    %78 = vperm.xlu0 %77, %v14
    %v79 = vpop.permute.xlu0 %78
    %81 = vset.pattern.permute.xlu0 2
    %82 = vperm.xlu0 %81, %v15
    %v83 = vpop.permute.xlu0 %82
    %85 = vset.pattern.permute.xlu0 2
    %86 = vperm.xlu0 %85, %v16
    %v87 = vpop.permute.xlu0 %86
    %89 = vset.pattern.permute.xlu0 2
    %90 = vperm.xlu0 %89, %v17
    %v91 = vpop.permute.xlu0 %90
    %93 = vset.pattern.permute.xlu0 2
    %94 = vperm.xlu0 %93, %v18
    %v95 = vpop.permute.xlu0 %94
    %97 = vset.pattern.permute.xlu0 2
    %98 = vperm.xlu0 %97, %v19
    %v99 = vpop.permute.xlu0 %98
    %101 = vset.pattern.permute.xlu0 2
    %102 = vperm.xlu0 %101, %v20
    %v103 = vpop.permute.xlu0 %102
    %v105 = vadd.f32 %v75, %v65
    %v106 = vadd.f32 %v79, %v66
    %v107 = vadd.f32 %v83, %v67
    %v108 = vadd.f32 %v87, %v68
    %v109 = vadd.f32 %v91, %v69
    %v110 = vadd.f32 %v95, %v70
    %v111 = vadd.f32 %v99, %v71
    %v112 = vadd.f32 %v103, %v72
    %113 = vset.pattern.permute.xlu0 1
    %114 = vperm.xlu0 %113, %v13
    %v115 = vpop.permute.xlu0 %114
    %117 = vset.pattern.permute.xlu0 1
    %118 = vperm.xlu0 %117, %v14
    %v119 = vpop.permute.xlu0 %118
    %121 = vset.pattern.permute.xlu0 1
    %122 = vperm.xlu0 %121, %v15
    %v123 = vpop.permute.xlu0 %122
    %125 = vset.pattern.permute.xlu0 1
    %126 = vperm.xlu0 %125, %v16
    %v127 = vpop.permute.xlu0 %126
    %129 = vset.pattern.permute.xlu0 1
    %130 = vperm.xlu0 %129, %v17
    %v131 = vpop.permute.xlu0 %130
    %133 = vset.pattern.permute.xlu0 1
    %134 = vperm.xlu0 %133, %v18
    %v135 = vpop.permute.xlu0 %134
    %137 = vset.pattern.permute.xlu0 1
    %138 = vperm.xlu0 %137, %v19
    %v139 = vpop.permute.xlu0 %138
    %141 = vset.pattern.permute.xlu0 1
    %142 = vperm.xlu0 %141, %v20
    %v143 = vpop.permute.xlu0 %142
    %v145 = vlaneseq
    %v146 = vshrl.u32 %v145, 7
    %v147 = vsub.s32 1, %v146
    %v148 = vrot.slane %v12, %v147
    %v149 = vmul.f32 %v115, %v148
    %v150 = vmul.f32 %v119, %v148
    %v151 = vmul.f32 %v123, %v148
    %v152 = vmul.f32 %v127, %v148
    %v153 = vmul.f32 %v131, %v148
    %v154 = vmul.f32 %v135, %v148
    %v155 = vmul.f32 %v139, %v148
    %v156 = vmul.f32 %v143, %v148
    %v157 = vadd.f32 %v105, %v149
    %v158 = vadd.f32 %v106, %v150
    %v159 = vadd.f32 %v107, %v151
    %v160 = vadd.f32 %v108, %v152
    %v161 = vadd.f32 %v109, %v153
    %v162 = vadd.f32 %v110, %v154
    %v163 = vadd.f32 %v111, %v155
    %v164 = vadd.f32 %v112, %v156
    %v165 = vtanh.pop %v157
    %v166 = vtanh.pop %v158
    %v167 = vtanh.pop %v159
    %v168 = vtanh.pop %v160
    %v169 = vtanh.pop %v161
    %v170 = vtanh.pop %v162
    %v171 = vtanh.pop %v163
    %v172 = vtanh.pop %v164
    %v173 = vld [vmem:[%s1] sm:$0x1]
    %174 = vset.pattern.permute.xlu0 3
    %175 = vperm.xlu0 %174, %v13
    %v176 = vpop.permute.xlu0 %175
    %178 = vset.pattern.permute.xlu0 3
    %179 = vperm.xlu0 %178, %v14
    %v180 = vpop.permute.xlu0 %179
    %182 = vset.pattern.permute.xlu0 3
    %183 = vperm.xlu0 %182, %v15
    %v184 = vpop.permute.xlu0 %183
    %186 = vset.pattern.permute.xlu0 3
    %187 = vperm.xlu0 %186, %v16
    %v188 = vpop.permute.xlu0 %187
    %190 = vset.pattern.permute.xlu0 3
    %191 = vperm.xlu0 %190, %v17
    %v192 = vpop.permute.xlu0 %191
    %194 = vset.pattern.permute.xlu0 3
    %195 = vperm.xlu0 %194, %v18
    %v196 = vpop.permute.xlu0 %195
    %198 = vset.pattern.permute.xlu0 3
    %199 = vperm.xlu0 %198, %v19
    %v200 = vpop.permute.xlu0 %199
    %202 = vset.pattern.permute.xlu0 3
    %203 = vperm.xlu0 %202, %v20
    %v204 = vpop.permute.xlu0 %203
    %v206 = vmul.f32 %v165, %v176
    %v207 = vmul.f32 %v166, %v180
    %v208 = vmul.f32 %v167, %v184
    %v209 = vmul.f32 %v168, %v188
    %v210 = vmul.f32 %v169, %v192
    %v211 = vmul.f32 %v170, %v196
    %v212 = vmul.f32 %v171, %v200
    %v213 = vmul.f32 %v172, %v204
    %v214 = vadd.f32 %v206, %v207
    %v215 = vadd.f32 %v214, %v208
    %v216 = vadd.f32 %v215, %v209
    %v217 = vadd.f32 %v216, %v210
    %v218 = vadd.f32 %v217, %v211
    %v219 = vadd.f32 %v218, %v212
    %v220 = vadd.f32 %v219, %v213
    %v221 = vrot.slane %v220, 4
    %v222 = vadd.f32 %v220, %v221
    %v223 = vrot.slane %v222, 2
    %v224 = vadd.f32 %v222, %v223
    %v225 = vrot.slane %v224, 1
    %v226 = vadd.f32 %v224, %v225
    %228 = vset.pattern.permute.xlu0 5
    %229 = vperm.xlu0 %228, %v173
    %v230 = vpop.permute.xlu0 %229
    %v232 = vadd.f32 %v226, %v230
    %v233 = vld [vmem:[%s1 + $0x1] sm:$0x1]
    %234 = vset.pattern.permute.xlu0 4
    %235 = vperm.xlu0 %234, %v13
    %v236 = vpop.permute.xlu0 %235
    %238 = vset.pattern.permute.xlu0 4
    %239 = vperm.xlu0 %238, %v14
    %v240 = vpop.permute.xlu0 %239
    %242 = vset.pattern.permute.xlu0 4
    %243 = vperm.xlu0 %242, %v15
    %v244 = vpop.permute.xlu0 %243
    %246 = vset.pattern.permute.xlu0 4
    %247 = vperm.xlu0 %246, %v16
    %v248 = vpop.permute.xlu0 %247
    %250 = vset.pattern.permute.xlu0 4
    %251 = vperm.xlu0 %250, %v17
    %v252 = vpop.permute.xlu0 %251
    %254 = vset.pattern.permute.xlu0 4
    %255 = vperm.xlu0 %254, %v18
    %v256 = vpop.permute.xlu0 %255
    %258 = vset.pattern.permute.xlu0 4
    %259 = vperm.xlu0 %258, %v19
    %v260 = vpop.permute.xlu0 %259
    %262 = vset.pattern.permute.xlu0 4
    %263 = vperm.xlu0 %262, %v20
    %v264 = vpop.permute.xlu0 %263
    %v266 = vmul.f32 %v165, %v236
    %v267 = vmul.f32 %v166, %v240
    %v268 = vmul.f32 %v167, %v244
    %v269 = vmul.f32 %v168, %v248
    %v270 = vmul.f32 %v169, %v252
    %v271 = vmul.f32 %v170, %v256
    %v272 = vmul.f32 %v171, %v260
    %v273 = vmul.f32 %v172, %v264
    %v274 = vadd.f32 %v266, %v267
    %v275 = vadd.f32 %v274, %v268
    %v276 = vadd.f32 %v275, %v269
    %v277 = vadd.f32 %v276, %v270
    %v278 = vadd.f32 %v277, %v271
    %v279 = vadd.f32 %v278, %v272
    %v280 = vadd.f32 %v279, %v273
    %v281 = vrot.slane %v280, 4
    %v282 = vadd.f32 %v280, %v281
    %v283 = vrot.slane %v282, 2
    %v284 = vadd.f32 %v282, %v283
    %v285 = vrot.slane %v284, 1
    %v286 = vadd.f32 %v284, %v285
    %288 = vset.pattern.permute.xlu0 5
    %289 = vperm.xlu0 %288, %v233
    %v290 = vpop.permute.xlu0 %289
    %v292 = vadd.f32 %v286, %v290
    %v294 = vrot.slane %v292, 7
    %vm296 = vcmask 1040384
    %v297 = vsel %vm296, %v232, %v294
    %298 = vst [vmem:[#allocation2] sm:$0x3] %v297
    // Predicated region
    $region10: #{tpu_custom_call.1} parent=1 // pred_check
      _
    $region11: #{tpu_custom_call.1} parent=1 // pred_check_branch
      %300 = sbr.rel (0) target = $region13
    $region12: #{tpu_custom_call.1} parent=1 // pred_region
      %s302 = ssub.s32 32, 32
      %303 = vsyncadd [#allocation3], %s302
      %s305 = sshll.u32 [#allocation2], 4
      %s306 = int_to_ptr.vmem [resolvable:$true] %s305
      %308 = dma.vmem_to_hbm [thread:$0]  %s306, 32, %s2, [#allocation3]
    $region13: #{tpu_custom_call.1} parent=1 // pred_fallthru
      _
    // Predicated region
    $region14: #{tpu_custom_call.1} parent=1 // pred_check
      _
    $region15: #{tpu_custom_call.1} parent=1 // pred_check_branch
      %310 = sbr.rel (0) target = $region17
    $region16: #{tpu_custom_call.1} parent=1 // pred_region
      %311 = dma.done [#allocation3], 32
    $region17: #{tpu_custom_call.1} parent=1 // pred_fallthru
      _
    %312 = vsyncpa [#allocation3], 1

</llo_original>
